<compile_context>
chip_gen: v5e
topology: v5e:2x2
jax: 0.10.0
libtpu: 0.0.40
codegen_flags: <defaults>
</compile_context>

<pallas_src>
import jax
import jax.numpy as jnp
from jax.experimental import pallas as pl
from jax.experimental.pallas import tpu as pltpu


# ------------------------------ fused kernels --------------------------------

def _make_fused_kernel(fusion_type, T, D, P, H, mxu_dtype):
    """Build one fused kernel body (encoder + head + fusion) for a fusion type."""
    inv_t = 1.0 / float(T)

    def mxu_dot(a, b):
        # Optional bf16 MXU path (f32 accumulate). f32 by default → casts are no-ops.
        return jnp.dot(a.astype(mxu_dtype), b.astype(mxu_dtype),
                       preferred_element_type=jnp.float32)

    def mean_over_time(ts_ref):
        ts = ts_ref[...].astype(jnp.float32)          # (TB, T, D), loaded once
        if T <= 32:
            # VPU accumulation over lane-resident rows (avoids XLU cross-sublane mean).
            acc = ts[:, 0, :]
            for t in range(1, T):
                acc = acc + ts[:, t, :]
        else:
            acc = jnp.sum(ts, axis=1)
        return acc * inv_t                            # (TB, D)

    if fusion_type == 'early':
        def kernel(ts_ref, phi_ref, we_ref, be_ref, wh_ref, bh_ref,
                   feat_ref, log_ref):
            x = mean_over_time(ts_ref)
            phi = phi_ref[...].astype(jnp.float32)
            # split-K == relu(mean(cat(ts, phi_bcast), dim=1) @ W_enc + b_enc)
            feat = jnp.maximum(
                mxu_dot(x, we_ref[:D, :]) + mxu_dot(phi, we_ref[D:, :]) + be_ref[...],
                0.0)
            feat_ref[...] = feat.astype(feat_ref.dtype)
            log_ref[...] = (mxu_dot(feat, wh_ref[...]) + bh_ref[...]).astype(log_ref.dtype)
        return kernel

    if fusion_type == 'intermediate':
        def kernel(ts_ref, phi_ref, we_ref, be_ref, wc_ref, bc_ref,
                   fused_ref, log_ref):
            x = mean_over_time(ts_ref)
            phi = phi_ref[...].astype(jnp.float32)
            feat = jnp.maximum(mxu_dot(x, we_ref[...]) + be_ref[...], 0.0)
            # The module returns cat(features, phi) as `features`; materialize once.
            # (Lane offset H is not 128-aligned -> masked store, unavoidable since
            #  this concat is a user-visible output of the module.)
            fused_ref[:, :H] = feat.astype(fused_ref.dtype)
            fused_ref[:, H:] = phi.astype(fused_ref.dtype)
            # Classifier logits via split-K of the concat — no read-back of fused_ref.
            log_ref[...] = (mxu_dot(feat, wc_ref[:H, :]) +
                            mxu_dot(phi, wc_ref[H:, :]) +
                            bc_ref[...]).astype(log_ref.dtype)
        return kernel

    if fusion_type == 'late':
        def kernel(ts_ref, phi_ref, we_ref, be_ref, wh_ref, bh_ref,
                   feat_ref, log_ref):
            x = mean_over_time(ts_ref)
            feat = jnp.maximum(mxu_dot(x, we_ref[...]) + be_ref[...], 0.0)
            feat_ref[...] = feat.astype(feat_ref.dtype)
            logits = mxu_dot(feat, wh_ref[...]) + bh_ref[...]
            phi_mean = jnp.sum(phi_ref[...].astype(jnp.float32),
                               axis=1, keepdims=True) * (1.0 / float(P))
            log_ref[...] = (logits + phi_mean).astype(log_ref.dtype)
        return kernel

    # 'none' / 'dpl': plain image model forward.
    def kernel(ts_ref, we_ref, be_ref, wh_ref, bh_ref, feat_ref, log_ref):
        x = mean_over_time(ts_ref)
        feat = jnp.maximum(mxu_dot(x, we_ref[...]) + be_ref[...], 0.0)
        feat_ref[...] = feat.astype(feat_ref.dtype)
        log_ref[...] = (mxu_dot(feat, wh_ref[...]) + bh_ref[...]).astype(log_ref.dtype)
    return kernel


# ------------------------------ glue ------------------------------------------

class ModelOutputs:
    def __init__(self, features=None, logits=None, **kwargs):
        self.dict = {'features': features, 'logits': logits}
        self.dict.update(kwargs)

    def __getitem__(self, key):
        return self.dict[key]

    def __getattr__(self, key):
        return self.dict[key]


class MultiModalFusion:
    """JAX/Pallas port of models/utils.MultiModalFusion.

    TODO(synk): the real image_model (BrainNetCNN / BNT / LSTM / ... from get_model)
    lives in external submodules not provided here; it is replaced by a deterministic
    mean-pool + linear + ReLU encoder with a linear head exposing the same
    (features, logits) interface.
    """

    def __init__(self, key, fusion_type, ts_dim, num_phe, hidden_size,
                 mxu_dtype=jnp.float32, batch_tile=512):
        assert fusion_type in ['early', 'intermediate', 'late', 'none', 'dpl'], \
            'Invalid fusion type'
        self.fusion_type = fusion_type
        self.ts_dim, self.num_phe, self.hidden_size = ts_dim, num_phe, hidden_size
        self.mxu_dtype = mxu_dtype
        # Batch tile: kept a multiple of 8; pick smaller (e.g. 256) for v7x's 64 MiB
        # VMEM when running at realistic D/H, larger on v5e/v6e.
        self.batch_tile = max(8, (batch_tile // 8) * 8)

        k1, k2, k3, k4, k5, k6 = jax.random.split(key, 6)
        in_dim = ts_dim + num_phe if fusion_type == 'early' else ts_dim
        wdt = mxu_dtype  # weights may be stored bf16 when the MXU runs bf16
        self.w_enc = (0.1 * jax.random.normal(k1, (in_dim, hidden_size),
                                              jnp.float32)).astype(wdt)
        self.b_enc = 0.1 * jax.random.normal(k2, (hidden_size,), jnp.float32)
        self.w_head = (0.1 * jax.random.normal(k3, (hidden_size, 2),
                                               jnp.float32)).astype(wdt)
        self.b_head = 0.1 * jax.random.normal(k4, (2,), jnp.float32)
        if fusion_type == 'intermediate':
            self.w_cls = (0.1 * jax.random.normal(
                k5, (hidden_size + num_phe, 2), jnp.float32)).astype(wdt)
            self.b_cls = 0.1 * jax.random.normal(k6, (2,), jnp.float32)

    def __call__(self, data):
        ts = data['timeseries']
        phi = data['phenotypes']
        B, T, D = ts.shape
        P = phi.shape[-1]
        H = self.hidden_size
        ft = self.fusion_type

        kernel = _make_fused_kernel(ft, T, D, P, H, self.mxu_dtype)

        TB = B if B <= self.batch_tile else self.batch_tile
        grid = (pl.cdiv(B, TB),)

        ts_spec = pl.BlockSpec((TB, T, D), lambda i: (i, 0, 0))
        phi_spec = pl.BlockSpec((TB, P), lambda i: (i, 0))

        def full_spec(arr):
            # whole-array block (weights / biases), same block for every batch step
            return pl.BlockSpec(arr.shape, lambda i: (0,) * arr.ndim)

        def row_spec(n):
            return pl.BlockSpec((TB, n), lambda i: (i, 0))

        if ft == 'early':
            ops = (ts, phi, self.w_enc, self.b_enc.reshape(1, -1),
                   self.w_head, self.b_head.reshape(1, -1))
            in_specs = [ts_spec, phi_spec] + [full_spec(o) for o in ops[2:]]
            out_shape = (jax.ShapeDtypeStruct((B, H), jnp.float32),
                         jax.ShapeDtypeStruct((B, 2), jnp.float32))
            out_specs = (row_spec(H), row_spec(2))
        elif ft == 'intermediate':
            ops = (ts, phi, self.w_enc, self.b_enc.reshape(1, -1),
                   self.w_cls, self.b_cls.reshape(1, -1))
            in_specs = [ts_spec, phi_spec] + [full_spec(o) for o in ops[2:]]
            out_shape = (jax.ShapeDtypeStruct((B, H + P), jnp.float32),
                         jax.ShapeDtypeStruct((B, 2), jnp.float32))
            out_specs = (row_spec(H + P), row_spec(2))
        elif ft == 'late':
            ops = (ts, phi, self.w_enc, self.b_enc.reshape(1, -1),
                   self.w_head, self.b_head.reshape(1, -1))
            in_specs = [ts_spec, phi_spec] + [full_spec(o) for o in ops[2:]]
            out_shape = (jax.ShapeDtypeStruct((B, H), jnp.float32),
                         jax.ShapeDtypeStruct((B, 2), jnp.float32))
            out_specs = (row_spec(H), row_spec(2))
        else:  # 'none' / 'dpl'
            ops = (ts, self.w_enc, self.b_enc.reshape(1, -1),
                   self.w_head, self.b_head.reshape(1, -1))
            in_specs = [ts_spec] + [full_spec(o) for o in ops[1:]]
            out_shape = (jax.ShapeDtypeStruct((B, H), jnp.float32),
                         jax.ShapeDtypeStruct((B, 2), jnp.float32))
            out_specs = (row_spec(H), row_spec(2))

        feats, logits = pl.pallas_call(
            kernel,
            grid=grid,
            in_specs=in_specs,
            out_specs=out_specs,
            out_shape=out_shape,
            compiler_params=pltpu.CompilerParams(
                dimension_semantics=("parallel",)),  # lets v7x split the batch grid
        )(*ops)
        return ModelOutputs(features=feats, logits=logits)


# ------------------------------ main ------------------------------------------

if __name__ == "__main__":
    B, T, D, P, H = 2, 8, 16, 4, 32

    key = jax.random.PRNGKey(0)
    k_ts, k_phi, k_early, k_mid, k_late, k_none = jax.random.split(key, 6)
    ts = jax.random.normal(k_ts, (B, T, D), jnp.float32)
    phi = jax.random.normal(k_phi, (B, P), jnp.float32)
    data = {'timeseries': ts, 'phenotypes': phi}

    ts_mean = jnp.mean(ts, axis=1)

    # --- early fusion (split-K == concat matmul, concat never materialized) ---
    m = MultiModalFusion(k_early, 'early', D, P, H)
    out = m(data)
    jax.block_until_ready(out.logits)
    x_cat = jnp.concatenate([ts_mean, phi], axis=-1)  # == mean(cat(ts, phi_bcast), 1)
    feats_ref = jnp.maximum(x_cat @ m.w_enc + m.b_enc, 0.0)
    logits_ref = feats_ref @ m.w_head + m.b_head
    assert jnp.allclose(out.features, feats_ref, atol=1e-4)
    assert jnp.allclose(out.logits, logits_ref, atol=1e-4)

    # --- intermediate fusion ---
    m = MultiModalFusion(k_mid, 'intermediate', D, P, H)
    out = m(data)
    jax.block_until_ready(out.logits)
    feats_ref = jnp.maximum(ts_mean @ m.w_enc + m.b_enc, 0.0)
    fused_ref = jnp.concatenate([feats_ref, phi], axis=-1)
    logits_ref = fused_ref @ m.w_cls + m.b_cls
    assert jnp.allclose(out.features, fused_ref, atol=1e-4)
    assert jnp.allclose(out.logits, logits_ref, atol=1e-4)

    # --- late fusion ---
    m = MultiModalFusion(k_late, 'late', D, P, H)
    out = m(data)
    jax.block_until_ready(out.logits)
    feats_ref = jnp.maximum(ts_mean @ m.w_enc + m.b_enc, 0.0)
    logits_ref = feats_ref @ m.w_head + m.b_head + jnp.mean(phi, axis=1, keepdims=True)
    assert jnp.allclose(out.features, feats_ref, atol=1e-4)
    assert jnp.allclose(out.logits, logits_ref, atol=1e-4)

    # --- none ---
    m = MultiModalFusion(k_none, 'none', D, P, H)
    out = m(data)
    jax.block_until_ready(out.logits)
    feats_ref = jnp.maximum(ts_mean @ m.w_enc + m.b_enc, 0.0)
    logits_ref = feats_ref @ m.w_head + m.b_head
    assert jnp.allclose(out.features, feats_ref, atol=1e-4)
    assert jnp.allclose(out.logits, logits_ref, atol=1e-4)

    print("KERNEL_OK")
</pallas_src>

<mosaic_0001>
module attributes {stable_mosaic.version = 11 : i64} {
  func.func @kernel(%arg0: i32, %arg1: memref<2x8x16xf32, #tpu.memory_space<vmem>>, %arg2: memref<2x4xf32, #tpu.memory_space<vmem>>, %arg3: memref<20x32xf32, #tpu.memory_space<vmem>>, %arg4: memref<1x32xf32, #tpu.memory_space<vmem>>, %arg5: memref<32x2xf32, #tpu.memory_space<vmem>>, %arg6: memref<1x2xf32, #tpu.memory_space<vmem>>, %arg7: memref<2x32xf32, #tpu.memory_space<vmem>>, %arg8: memref<2x2xf32, #tpu.memory_space<vmem>>) attributes {dimension_semantics = [#tpu.dimension_semantics<parallel>], iteration_bounds = array<i64: 1>, scalar_prefetch = 0 : i64, scratch_operands = 0 : i64, tpu.core_type = #tpu.core_type<tc>, window_params = [{transform_indices = @transform_0, window_bounds = array<i64: 2, 8, 16>}, {transform_indices = @transform_1, window_bounds = array<i64: 2, 4>}, {pipeline_mode = #tpu.pipeline_mode<synchronous>, transform_indices = @transform_2, window_bounds = array<i64: 20, 32>}, {pipeline_mode = #tpu.pipeline_mode<synchronous>, transform_indices = @transform_3, window_bounds = array<i64: 1, 32>}, {pipeline_mode = #tpu.pipeline_mode<synchronous>, transform_indices = @transform_4, window_bounds = array<i64: 32, 2>}, {pipeline_mode = #tpu.pipeline_mode<synchronous>, transform_indices = @transform_5, window_bounds = array<i64: 1, 2>}, {transform_indices = @transform_6, window_bounds = array<i64: 2, 32>}, {transform_indices = @transform_7, window_bounds = array<i64: 2, 2>}]} {
    %c0 = arith.constant 0 : index
    %c0_0 = arith.constant 0 : index
    %c0_1 = arith.constant 0 : index
    %0 = vector.load %arg1[%c0, %c0_0, %c0_1] : memref<2x8x16xf32, #tpu.memory_space<vmem>>, vector<2x8x16xf32>
    %1 = vector.extract_strided_slice %0 {offsets = [0, 0, 0], sizes = [2, 1, 16], strides = [1, 1, 1]} : vector<2x8x16xf32> to vector<2x1x16xf32>
    %2 = vector.shape_cast %1 : vector<2x1x16xf32> to vector<2x16xf32>
    %3 = vector.extract_strided_slice %0 {offsets = [0, 1, 0], sizes = [2, 1, 16], strides = [1, 1, 1]} : vector<2x8x16xf32> to vector<2x1x16xf32>
    %4 = vector.shape_cast %3 : vector<2x1x16xf32> to vector<2x16xf32>
    %5 = arith.addf %2, %4 : vector<2x16xf32>
    %6 = vector.extract_strided_slice %0 {offsets = [0, 2, 0], sizes = [2, 1, 16], strides = [1, 1, 1]} : vector<2x8x16xf32> to vector<2x1x16xf32>
    %7 = vector.shape_cast %6 : vector<2x1x16xf32> to vector<2x16xf32>
    %8 = arith.addf %5, %7 : vector<2x16xf32>
    %9 = vector.extract_strided_slice %0 {offsets = [0, 3, 0], sizes = [2, 1, 16], strides = [1, 1, 1]} : vector<2x8x16xf32> to vector<2x1x16xf32>
    %10 = vector.shape_cast %9 : vector<2x1x16xf32> to vector<2x16xf32>
    %11 = arith.addf %8, %10 : vector<2x16xf32>
    %12 = vector.extract_strided_slice %0 {offsets = [0, 4, 0], sizes = [2, 1, 16], strides = [1, 1, 1]} : vector<2x8x16xf32> to vector<2x1x16xf32>
    %13 = vector.shape_cast %12 : vector<2x1x16xf32> to vector<2x16xf32>
    %14 = arith.addf %11, %13 : vector<2x16xf32>
    %15 = vector.extract_strided_slice %0 {offsets = [0, 5, 0], sizes = [2, 1, 16], strides = [1, 1, 1]} : vector<2x8x16xf32> to vector<2x1x16xf32>
    %16 = vector.shape_cast %15 : vector<2x1x16xf32> to vector<2x16xf32>
    %17 = arith.addf %14, %16 : vector<2x16xf32>
    %18 = vector.extract_strided_slice %0 {offsets = [0, 6, 0], sizes = [2, 1, 16], strides = [1, 1, 1]} : vector<2x8x16xf32> to vector<2x1x16xf32>
    %19 = vector.shape_cast %18 : vector<2x1x16xf32> to vector<2x16xf32>
    %20 = arith.addf %17, %19 : vector<2x16xf32>
    %21 = vector.extract_strided_slice %0 {offsets = [0, 7, 0], sizes = [2, 1, 16], strides = [1, 1, 1]} : vector<2x8x16xf32> to vector<2x1x16xf32>
    %22 = vector.shape_cast %21 : vector<2x1x16xf32> to vector<2x16xf32>
    %23 = arith.addf %20, %22 : vector<2x16xf32>
    %cst = arith.constant 1.250000e-01 : f32
    %24 = vector.broadcast %cst : f32 to vector<2x16xf32>
    %25 = arith.mulf %23, %24 : vector<2x16xf32>
    %c0_2 = arith.constant 0 : index
    %c0_3 = arith.constant 0 : index
    %26 = vector.load %arg2[%c0_2, %c0_3] : memref<2x4xf32, #tpu.memory_space<vmem>>, vector<2x4xf32>
    %c0_4 = arith.constant 0 : index
    %c0_5 = arith.constant 0 : index
    %27 = vector.load %arg3[%c0_4, %c0_5] : memref<20x32xf32, #tpu.memory_space<vmem>>, vector<16x32xf32>
    %cst_6 = arith.constant dense<0.000000e+00> : vector<2x32xf32>
    %28 = tpu.matmul %25, %27, %cst_6 {dimension_numbers = #tpu.dot_dimension_numbers<[1], [0], [0], [1], [0, 0, 1, 1], [], []>} : vector<2x16xf32>, vector<16x32xf32>, vector<2x32xf32> -> vector<2x32xf32>
    %c16 = arith.constant 16 : index
    %c0_7 = arith.constant 0 : index
    %29 = vector.load %arg3[%c16, %c0_7] : memref<20x32xf32, #tpu.memory_space<vmem>>, vector<4x32xf32>
    %cst_8 = arith.constant dense<0.000000e+00> : vector<2x32xf32>
    %30 = tpu.matmul %26, %29, %cst_8 {dimension_numbers = #tpu.dot_dimension_numbers<[1], [0], [0], [1], [0, 0, 1, 1], [], []>} : vector<2x4xf32>, vector<4x32xf32>, vector<2x32xf32> -> vector<2x32xf32>
    %31 = arith.addf %28, %30 : vector<2x32xf32>
    %c0_9 = arith.constant 0 : index
    %c0_10 = arith.constant 0 : index
    %32 = vector.load %arg4[%c0_9, %c0_10] : memref<1x32xf32, #tpu.memory_space<vmem>>, vector<1x32xf32>
    %33 = vector.broadcast %32 : vector<1x32xf32> to vector<2x32xf32>
    %34 = arith.addf %31, %33 : vector<2x32xf32>
    %cst_11 = arith.constant 0.000000e+00 : f32
    %35 = vector.broadcast %cst_11 : f32 to vector<2x32xf32>
    %36 = arith.maximumf %34, %35 : vector<2x32xf32>
    %c0_12 = arith.constant 0 : index
    %c0_13 = arith.constant 0 : index
    %37 = vector.load %arg7[%c0_12, %c0_13] : memref<2x32xf32, #tpu.memory_space<vmem>>, vector<2x32xf32>
    tpu.vector_store %arg7[%c0_12, %c0_13], %36 {strides = array<i32>} : memref<2x32xf32, #tpu.memory_space<vmem>>, vector<2x32xf32>,
    %c0_14 = arith.constant 0 : index
    %c0_15 = arith.constant 0 : index
    %38 = vector.load %arg5[%c0_14, %c0_15] : memref<32x2xf32, #tpu.memory_space<vmem>>, vector<32x2xf32>
    %cst_16 = arith.constant dense<0.000000e+00> : vector<2x2xf32>
    %39 = tpu.matmul %36, %38, %cst_16 {dimension_numbers = #tpu.dot_dimension_numbers<[1], [0], [0], [1], [0, 0, 1, 1], [], []>} : vector<2x32xf32>, vector<32x2xf32>, vector<2x2xf32> -> vector<2x2xf32>
    %c0_17 = arith.constant 0 : index
    %c0_18 = arith.constant 0 : index
    %40 = vector.load %arg6[%c0_17, %c0_18] : memref<1x2xf32, #tpu.memory_space<vmem>>, vector<1x2xf32>
    %41 = vector.broadcast %40 : vector<1x2xf32> to vector<2x2xf32>
    %42 = arith.addf %39, %41 : vector<2x2xf32>
    %c0_19 = arith.constant 0 : index
    %c0_20 = arith.constant 0 : index
    %43 = vector.load %arg8[%c0_19, %c0_20] : memref<2x2xf32, #tpu.memory_space<vmem>>, vector<2x2xf32>
    tpu.vector_store %arg8[%c0_19, %c0_20], %42 {strides = array<i32>} : memref<2x2xf32, #tpu.memory_space<vmem>>, vector<2x2xf32>,
    return
  }
  func.func @transform_0(%arg0: i32) -> (i32, i32, i32) {
    %c0_i32 = arith.constant 0 : i32
    %c0_i32_0 = arith.constant 0 : i32
    %c0_i32_1 = arith.constant 0 : i32
    return %arg0, %c0_i32, %c0_i32_0 : i32, i32, i32
  }
  func.func @transform_1(%arg0: i32) -> (i32, i32) {
    %c0_i32 = arith.constant 0 : i32
    %c0_i32_0 = arith.constant 0 : i32
    return %arg0, %c0_i32 : i32, i32
  }
  func.func @transform_2(%arg0: i32) -> (i32, i32) {
    %c0_i32 = arith.constant 0 : i32
    %c0_i32_0 = arith.constant 0 : i32
    %c0_i32_1 = arith.constant 0 : i32
    return %c0_i32, %c0_i32_0 : i32, i32
  }
  func.func @transform_3(%arg0: i32) -> (i32, i32) {
    %c0_i32 = arith.constant 0 : i32
    %c0_i32_0 = arith.constant 0 : i32
    %c0_i32_1 = arith.constant 0 : i32
    return %c0_i32, %c0_i32_0 : i32, i32
  }
  func.func @transform_4(%arg0: i32) -> (i32, i32) {
    %c0_i32 = arith.constant 0 : i32
    %c0_i32_0 = arith.constant 0 : i32
    %c0_i32_1 = arith.constant 0 : i32
    return %c0_i32, %c0_i32_0 : i32, i32
  }
  func.func @transform_5(%arg0: i32) -> (i32, i32) {
    %c0_i32 = arith.constant 0 : i32
    %c0_i32_0 = arith.constant 0 : i32
    %c0_i32_1 = arith.constant 0 : i32
    return %c0_i32, %c0_i32_0 : i32, i32
  }
  func.func @transform_6(%arg0: i32) -> (i32, i32) {
    %c0_i32 = arith.constant 0 : i32
    %c0_i32_0 = arith.constant 0 : i32
    return %arg0, %c0_i32 : i32, i32
  }
  func.func @transform_7(%arg0: i32) -> (i32, i32) {
    %c0_i32 = arith.constant 0 : i32
    %c0_i32_0 = arith.constant 0 : i32
    return %arg0, %c0_i32 : i32, i32
  }
}

</mosaic_0001>

<llo_original>
// kernel: tpu_custom_call.1
$region0: #{tpu_custom_call.1}
  #allocation0 [shape = 'u32[]', space=smem, size = 0x4, offset = 0x4, fixed_abs, tag = 'smem constant byte address 0x4 - core index']
  #allocation1 [shape = 'u32[72,128]{1,0:T(1,128)}', space=vmem, size = 0x9000, scoped, tag = 'internal scratch']
  %s0 = inlined_call_operand.hbm [shape: f32[2,8,16], index: 0, kind: input, shape index: {}]
  %s1 = inlined_call_operand.vmem [shape: f32[2,4], index: 1, kind: input, shape index: {}]
  %s2 = inlined_call_operand.vmem [shape: f32[20,32], index: 2, kind: input, shape index: {}]
  %s3 = inlined_call_operand.vmem [shape: f32[1,32], index: 3, kind: input, shape index: {}]
  %s4 = inlined_call_operand.vmem [shape: f32[32,2], index: 4, kind: input, shape index: {}]
  %s5 = inlined_call_operand.vmem [shape: f32[1,2], index: 5, kind: input, shape index: {}]
  %s6 = inlined_call_operand.hbm [shape: f32[2,32], index: 6, kind: output, shape index: {0}]
  %s7 = inlined_call_operand.hbm [shape: f32[2,2], index: 7, kind: output, shape index: {1}]
  %8 = xla_tuple %s6, %s7
  %s9 = sld [smem:[#allocation0]]
  $region46: #{tpu_custom_call.1} parent=0
    _
  %s11 = ssub.s32 1, %s9
  %s12 = scalar_select 0, %s11, %s9
  $region1: #{tpu_custom_call.1} parent=0
    #allocation2 [shape = 'u8[8192]{0}', space=vmem, size = 0x2000, scoped, tag = 'input window, operand 0, single buffered']
    #allocation3 [shape = 's32[1]{0}', space=sflag, size = 0x4, scoped, tag = 'scoped memory for tpu_custom_call.1']
    #allocation4 [shape = 's32[1]{0}', space=sflag, size = 0x4, scoped, tag = 'scoped memory for tpu_custom_call.1']
    #allocation5 [shape = 'u8[1024]{0}', space=vmem, size = 0x400, scoped, tag = 'output window, operand 0, single buffered']
    #allocation6 [shape = 'u8[1024]{0}', space=vmem, size = 0x400, scoped, tag = 'output window, operand 1, single buffered']
    #allocation7 [shape = 's32[1]{0}', space=sflag, size = 0x4, scoped, tag = 'scoped memory for tpu_custom_call.1']
    %13 = vsyncpa [#allocation3], 0
    %14 = vsyncpa [#allocation4], 0
    %15 = vsyncpa [#allocation7], 0
    // Predicated region
    $region2: #{tpu_custom_call.1} parent=1 // pred_check
      _
    $region3: #{tpu_custom_call.1} parent=1 // pred_check_branch
      %17 = sbr.rel (0) target = $region5
    $region4: #{tpu_custom_call.1} parent=1 // pred_region
      %19 = vsyncadd [#allocation3], 0
      %s20 = sshll.u32 %s0, 4
      %s21 = int_to_ptr.hbm [resolvable:$true] %s20
      %s22 = sshll.u32 [#allocation2], 4
      %s23 = int_to_ptr.vmem [resolvable:$true] %s22
      %28 = dma.hbm_to_vmem [thread:$0]  %s21, 256, %s23, [#allocation3], 128, 128, 8
    $region5: #{tpu_custom_call.1} parent=1 // pred_fallthru
      _
    // Predicated region
    $region6: #{tpu_custom_call.1} parent=1 // pred_check
      _
    $region7: #{tpu_custom_call.1} parent=1 // pred_check_branch
      %30 = sbr.rel (0) target = $region9
    $region8: #{tpu_custom_call.1} parent=1 // pred_region
      _
    $region9: #{tpu_custom_call.1} parent=1 // pred_fallthru
      _
    // Predicated region
    $region10: #{tpu_custom_call.1} parent=1 // pred_check
      _
    $region11: #{tpu_custom_call.1} parent=1 // pred_check_branch
      %32 = sbr.rel (0) target = $region13
    $region12: #{tpu_custom_call.1} parent=1 // pred_region
      _
    $region13: #{tpu_custom_call.1} parent=1 // pred_fallthru
      _
    // Predicated region
    $region14: #{tpu_custom_call.1} parent=1 // pred_check
      _
    $region15: #{tpu_custom_call.1} parent=1 // pred_check_branch
      %34 = sbr.rel (0) target = $region17
    $region16: #{tpu_custom_call.1} parent=1 // pred_region
      _
    $region17: #{tpu_custom_call.1} parent=1 // pred_fallthru
      _
    // Predicated region
    $region18: #{tpu_custom_call.1} parent=1 // pred_check
      _
    $region19: #{tpu_custom_call.1} parent=1 // pred_check_branch
      %36 = sbr.rel (0) target = $region21
    $region20: #{tpu_custom_call.1} parent=1 // pred_region
      _
    $region21: #{tpu_custom_call.1} parent=1 // pred_fallthru
      _
    // Predicated region
    $region22: #{tpu_custom_call.1} parent=1 // pred_check
      _
    $region23: #{tpu_custom_call.1} parent=1 // pred_check_branch
      %38 = sbr.rel (0) target = $region25
    $region24: #{tpu_custom_call.1} parent=1 // pred_region
      _
    $region25: #{tpu_custom_call.1} parent=1 // pred_fallthru
      _
    // Predicated region
    $region26: #{tpu_custom_call.1} parent=1 // pred_check
      _
    $region27: #{tpu_custom_call.1} parent=1 // pred_check_branch
      %40 = sbr.rel (0) target = $region29
    $region28: #{tpu_custom_call.1} parent=1 // pred_region
      %42 = dma.done [#allocation3], 256
    $region29: #{tpu_custom_call.1} parent=1 // pred_fallthru
      _
    %v43 = vld [vmem:[#allocation2] sm:$0xff]
    %v44 = vld [vmem:[#allocation2 + $0x8] sm:$0xff]
    %v47 = vrot.slane %v43, 1
    %v48 = vrot.slane %v44, 1
    %v51 = vadd.f32 %v43, %v47
    %v52 = vadd.f32 %v44, %v48
    %v53 = vrot.slane %v43, 2
    %v54 = vrot.slane %v44, 2
    %v57 = vadd.f32 %v51, %v53
    %v58 = vadd.f32 %v52, %v54
    %v59 = vrot.slane %v43, 3
    %v60 = vrot.slane %v44, 3
    %v63 = vadd.f32 %v57, %v59
    %v64 = vadd.f32 %v58, %v60
    %v65 = vrot.slane %v43, 4
    %v66 = vrot.slane %v44, 4
    %v69 = vadd.f32 %v63, %v65
    %v70 = vadd.f32 %v64, %v66
    %v71 = vrot.slane %v43, 5
    %v72 = vrot.slane %v44, 5
    %v75 = vadd.f32 %v69, %v71
    %v76 = vadd.f32 %v70, %v72
    %v77 = vrot.slane %v43, 6
    %v78 = vrot.slane %v44, 6
    %v81 = vadd.f32 %v75, %v77
    %v82 = vadd.f32 %v76, %v78
    %v83 = vrot.slane %v43, 7
    %v84 = vrot.slane %v44, 7
    %v87 = vadd.f32 %v81, %v83
    %v88 = vadd.f32 %v82, %v84
    %v89 = vmul.f32 %v87, 0.125
    %v90 = vmul.f32 %v88, 0.125
    %v91 = vld [vmem:[%s1] sm:$0x3]
    %v92 = vld [vmem:[%s2] sm:$0xff]
    %v93 = vld [vmem:[%s2 + $0x8] sm:$0xff]
    %v94 = vld [vmem:[%s2 + $0x10] sm:$0xf]
    %vm95 = vcmask 31744
    %v97 = vsel %vm95, %v91, 0
    %vm99 = vcmask 1043456
    %v101 = vsel %vm99, %v94, 0
    %103 = vmatpush.msra.mxu0 0.0
    %104 = vmatpush.msra.mxu0 0.0
    %105 = vmatpush.msra.mxu0 0.0
    %106 = vmatpush.msra.mxu0 0.0
    %107 = vmatpush.msra.mxu0 0.0
    %108 = vmatpush.msra.mxu0 0.0
    %109 = vmatpush.msra.mxu0 0.0
    %110 = vmatpush.msra.mxu0 0.0
    %111 = vmatpush.msra.mxu0 0.0
    %112 = vmatpush.msra.mxu0 0.0
    %113 = vmatpush.msra.mxu0 0.0
    %114 = vmatpush.msra.mxu0 0.0
    %115 = vmatpush.msra.mxu0 0.0
    %116 = vmatpush.msra.mxu0 0.0
    %117 = vmatpush.msra.mxu0 0.0
    %118 = vmatpush.msra.mxu0 %v101
    %119 = vmatmul.f32.gmra.mxu0 %v97
    %v120 = vpop.f32.mrf.mxu0
    %v121 = vadd.f32 0.0, %v120
    %122 = vdwg.mxu0
    %v125 = vrot.slane %v90, 7
    %vm126 = vcmask 1041409
    %v127 = vsel %vm126, %v125, %v89
    %vm128 = vcmask 130048
    %v129 = vsel %vm128, %v127, 0
    %131 = vmatpush.msra.mxu0 0.0
    %132 = vmatpush.msra.mxu0 0.0
    %133 = vmatpush.msra.mxu0 0.0
    %134 = vmatpush.msra.mxu0 0.0
    %135 = vmatpush.msra.mxu0 0.0
    %136 = vmatpush.msra.mxu0 0.0
    %137 = vmatpush.msra.mxu0 0.0
    %138 = vmatpush.msra.mxu0 0.0
    %139 = vmatpush.msra.mxu0 0.0
    %140 = vmatpush.msra.mxu0 0.0
    %141 = vmatpush.msra.mxu0 0.0
    %142 = vmatpush.msra.mxu0 0.0
    %143 = vmatpush.msra.mxu0 0.0
    %144 = vmatpush.msra.mxu0 0.0
    %145 = vmatpush.msra.mxu0 %v93
    %146 = vmatpush.msra.mxu0 %v92
    %147 = vmatmul.f32.gmra.mxu0 %v129
    %v148 = vpop.f32.mrf.mxu0
    %v149 = vadd.f32 %v121, %v148
    %150 = vdwg.mxu0
    %v151 = vld [vmem:[%s3] sm:$0x1]
    %v153 = vperm.slane %v151, 0
    %v155 = vadd.f32 %v149, %v153
    %v156 = vmax.f32 %v155, 0.0
    %vm157 = vcmask 254976
    %158 = vst.msk [vmem:[#allocation5] sm:$0x3] %vm157, %v156
    %v159 = vld [vmem:[%s4] sm:$0xff]
    %v160 = vld [vmem:[%s4 + $0x8] sm:$0xff]
    %v161 = vld [vmem:[%s4 + $0x10] sm:$0xff]
    %v162 = vld [vmem:[%s4 + $0x18] sm:$0xff]
    %v163 = vld [vmem:[%s5] sm:$0x1]
    %v165 = vperm.slane %v163, 0
    %vm167 = vcmask 261120
    %v169 = vsel %vm167, %v156, 0
    %171 = vmatpush.msra.mxu0 0.0
    %172 = vmatpush.msra.mxu0 0.0
    %173 = vmatpush.msra.mxu0 0.0
    %174 = vmatpush.msra.mxu0 0.0
    %175 = vmatpush.msra.mxu0 0.0
    %176 = vmatpush.msra.mxu0 0.0
    %177 = vmatpush.msra.mxu0 0.0
    %178 = vmatpush.msra.mxu0 0.0
    %179 = vmatpush.msra.mxu0 0.0
    %180 = vmatpush.msra.mxu0 0.0
    %181 = vmatpush.msra.mxu0 0.0
    %182 = vmatpush.msra.mxu0 0.0
    %183 = vmatpush.msra.mxu0 %v162
    %184 = vmatpush.msra.mxu0 %v161
    %185 = vmatpush.msra.mxu0 %v160
    %186 = vmatpush.msra.mxu0 %v159
    %187 = vmatmul.f32.gmra.mxu0 %v169
    %v188 = vpop.f32.mrf.mxu0
    %v189 = vadd.f32 %v165, %v188
    %190 = vdwg.mxu0
    %vm191 = vcmask 9216
    %192 = vst.msk [vmem:[#allocation6] sm:$0x3] %vm191, %v189
    // Predicated region
    $region30: #{tpu_custom_call.1} parent=1 // pred_check
      _
    $region31: #{tpu_custom_call.1} parent=1 // pred_check_branch
      %194 = sbr.rel (0) target = $region33
    $region32: #{tpu_custom_call.1} parent=1 // pred_region
      %196 = vsyncadd [#allocation4], 0
      %s198 = sshll.u32 [#allocation5], 4
      %s199 = int_to_ptr.vmem [resolvable:$true] %s198
      %s200 = sshll.u32 %s6, 4
      %s201 = int_to_ptr.hbm [resolvable:$true] %s200
      %203 = dma.vmem_to_hbm [thread:$0]  %s199, 32, %s201, [#allocation4]
    $region33: #{tpu_custom_call.1} parent=1 // pred_fallthru
      _
    // Predicated region
    $region34: #{tpu_custom_call.1} parent=1 // pred_check
      _
    $region35: #{tpu_custom_call.1} parent=1 // pred_check_branch
      %205 = sbr.rel (0) target = $region37
    $region36: #{tpu_custom_call.1} parent=1 // pred_region
      %207 = vsyncadd [#allocation7], 0
      %s209 = sshll.u32 [#allocation6], 4
      %s210 = int_to_ptr.vmem [resolvable:$true] %s209
      %s211 = sshll.u32 %s7, 4
      %s212 = int_to_ptr.hbm [resolvable:$true] %s211
      %214 = dma.vmem_to_hbm [thread:$0]  %s210, 32, %s212, [#allocation7]
    $region37: #{tpu_custom_call.1} parent=1 // pred_fallthru
      _
    // Predicated region
    $region38: #{tpu_custom_call.1} parent=1 // pred_check
      _
    $region39: #{tpu_custom_call.1} parent=1 // pred_check_branch
      %216 = sbr.rel (0) target = $region41
    $region40: #{tpu_custom_call.1} parent=1 // pred_region
      %218 = dma.done [#allocation4], 32
    $region41: #{tpu_custom_call.1} parent=1 // pred_fallthru
      _
    // Predicated region
    $region42: #{tpu_custom_call.1} parent=1 // pred_check
      _
    $region43: #{tpu_custom_call.1} parent=1 // pred_check_branch
      %220 = sbr.rel (0) target = $region45
    $region44: #{tpu_custom_call.1} parent=1 // pred_region
      %222 = dma.done [#allocation7], 32
    $region45: #{tpu_custom_call.1} parent=1 // pred_fallthru
      _
    %223 = vsyncpa [#allocation3], 1
    %224 = vsyncpa [#allocation4], 1
    %225 = vsyncpa [#allocation7], 1

</llo_original>
